<compile_context>
chip_gen: v6e
topology: v6e:2x2x1
jax: 0.10.0
libtpu: 0.0.40
codegen_flags: <defaults>
</compile_context>

<pallas_src>
import functools

import jax
import jax.numpy as jnp
from jax.experimental import pallas as pl
from jax.experimental.pallas import tpu as pltpu


def _round_up(x, m):
    return ((x + m - 1) // m) * m


def _paf_fused_kernel(x_ref, w_ref, b_ref, cls_ref, reg0_ref, reg1_ref, *,
                      out_f, off_reg0, off_reg1, dilation):
    # x_ref: (C_in, T) pixel slab; w_ref: (rows, C_in); b_ref: (rows, 1) f32.
    y = jnp.dot(w_ref[...], x_ref[...],
                preferred_element_type=jnp.float32) + b_ref[...]

    # class head: sigmoid in f32 (row group starts at 0, sublane-aligned).
    cls_ref[...] = jax.nn.sigmoid(y[:out_f]).astype(cls_ref.dtype)

    # regression heads (row-group starts are 8-aligned -> no sublane relayout).
    r0 = y[off_reg0:off_reg0 + 2 * out_f]
    r1 = y[off_reg1:off_reg1 + 2 * out_f]
    if dilation != 1.0:  # elided at trace time for the module default of 1.0
        r0 = r0 * dilation
        r1 = r1 * dilation
    reg0_ref[...] = r0.astype(reg0_ref.dtype)
    reg1_ref[...] = r1.astype(reg1_ref.dtype)

    # TODO(synk): predict_spread=True branch (clamp(-3, 5)) and quad>0 dequad
    # interleaving are not exercised by the module defaults.


def _auto_tile_hw(HW, C_in, itemsize, target_input_bytes=2 << 20):
    """Pixel-tile size: ~target bytes of input per grid step, 128-aligned."""
    t = target_input_bytes // max(1, C_in * itemsize)
    t = max(512, min(int(t), 2048))
    t = _round_up(t, 128)
    t = max(128, min(t, _round_up(HW, 128)))
    # v7x megacore: guarantee >= 2 pixel tiles whenever HW allows it so both
    # TensorCores get work even for batch-1 inference. Harmless on v5e/v6e.
    if HW > 128 and pl.cdiv(HW, t) < 2:
        t = _round_up(pl.cdiv(HW, 2), 128)
    return t


def npart_association_fields(x_nchw, params, *, n_associations, quad=0,
                             dilation=1.0, tile_hw=None):
    """Forward pass. Returns [class_x, reg0, reg1] with PyTorch NCHW shapes."""
    assert quad == 0, "quad>0 dequad path not implemented (module default is 0)"
    N, C_in, H, W = x_nchw.shape
    out_f = n_associations * 4 ** quad
    HW = H * W
    out_dtype = x_nchw.dtype
    itemsize = jnp.dtype(out_dtype).itemsize

    wc, bc, wr0, br0, wr1, br1 = params

    # --- fused, sublane-aligned weight/bias -------------------------------
    off_reg0 = _round_up(out_f, 8)
    off_reg1 = off_reg0 + _round_up(2 * out_f, 8)
    total_rows = _round_up(off_reg1 + 2 * out_f, 8)

    w_fused = jnp.zeros((total_rows, C_in), dtype=out_dtype)
    w_fused = w_fused.at[:out_f].set(wc.T.astype(out_dtype))
    w_fused = w_fused.at[off_reg0:off_reg0 + 2 * out_f].set(wr0.T.astype(out_dtype))
    w_fused = w_fused.at[off_reg1:off_reg1 + 2 * out_f].set(wr1.T.astype(out_dtype))

    b_fused = jnp.zeros((total_rows, 1), dtype=jnp.float32)
    b_fused = b_fused.at[:out_f, 0].set(bc.reshape(-1).astype(jnp.float32))
    b_fused = b_fused.at[off_reg0:off_reg0 + 2 * out_f, 0].set(
        br0.reshape(-1).astype(jnp.float32))
    b_fused = b_fused.at[off_reg1:off_reg1 + 2 * out_f, 0].set(
        br1.reshape(-1).astype(jnp.float32))

    # --- tiling / grid (no padding, no output trims) ----------------------
    if tile_hw is None:
        tile_hw = _auto_tile_hw(HW, C_in, itemsize)
    else:
        tile_hw = max(128, min(_round_up(tile_hw, 128), _round_up(HW, 128)))

    x = x_nchw.reshape(N, C_in, HW)
    grid = (N, pl.cdiv(HW, tile_hw))   # Pallas masks the partial boundary block

    in_specs = [
        pl.BlockSpec((pl.Squeezed(), C_in, tile_hw), lambda n, t: (n, 0, t)),
        pl.BlockSpec((total_rows, C_in), lambda n, t: (0, 0)),  # fused weight (resident)
        pl.BlockSpec((total_rows, 1), lambda n, t: (0, 0)),     # fused bias (resident)
    ]
    out_specs = [
        pl.BlockSpec((pl.Squeezed(), out_f, tile_hw), lambda n, t: (n, 0, t)),
        pl.BlockSpec((pl.Squeezed(), 2 * out_f, tile_hw), lambda n, t: (n, 0, t)),
        pl.BlockSpec((pl.Squeezed(), 2 * out_f, tile_hw), lambda n, t: (n, 0, t)),
    ]
    out_shape = [
        jax.ShapeDtypeStruct((N, out_f, HW), out_dtype),
        jax.ShapeDtypeStruct((N, 2 * out_f, HW), out_dtype),
        jax.ShapeDtypeStruct((N, 2 * out_f, HW), out_dtype),
    ]

    # --- explicit VMEM budget (keeps double-buffering on v5e/v6e/v7x) -----
    vmem_est = (
        2 * C_in * tile_hw * itemsize            # x, double-buffered
        + 2 * 5 * out_f * tile_hw * itemsize     # 3 outputs, double-buffered
        + 2 * total_rows * C_in * itemsize       # fused weight
        + 2 * total_rows * 4                     # fused bias
        + total_rows * tile_hw * 4               # f32 accumulator y
    )
    vmem_limit = min(max(2 * vmem_est, 16 << 20), 48 << 20)  # 48 MiB cap (v7x-safe)

    # --- cost hint for the XLA scheduler -----------------------------------
    cost = pl.CostEstimate(
        flops=2 * 5 * out_f * C_in * HW * N,
        transcendentals=out_f * HW * N,
        bytes_accessed=(N * C_in * HW * itemsize
                        + total_rows * (C_in + 1) * itemsize
                        + N * 5 * out_f * HW * itemsize),
    )

    cls, r0, r1 = pl.pallas_call(
        functools.partial(_paf_fused_kernel, out_f=out_f, off_reg0=off_reg0,
                          off_reg1=off_reg1, dilation=dilation),
        grid=grid,
        in_specs=in_specs,
        out_specs=out_specs,
        out_shape=out_shape,
        compiler_params=pltpu.CompilerParams(
            dimension_semantics=("parallel", "parallel"),
            vmem_limit_bytes=int(vmem_limit)),
        cost_estimate=cost,
    )(x, w_fused, b_fused)

    # Pure-view reshapes in NCHW layout (no transpose, no copy of real data).
    cls = cls.reshape(N, out_f, H, W)
    r0 = r0.reshape(N, out_f, 2, H, W)
    r1 = r1.reshape(N, out_f, 2, H, W)
    return [cls, r0, r1]


def _reference(x_nchw, params, *, n_associations, dilation=1.0):
    """Plain-JAX reference mirroring the PyTorch module (defaults)."""
    wc, bc, wr0, br0, wr1, br1 = params
    N, C_in, H, W = x_nchw.shape
    out_f = n_associations
    x = jnp.transpose(x_nchw, (0, 2, 3, 1)).reshape(-1, C_in).astype(jnp.float32)
    cls = jax.nn.sigmoid(x @ wc + bc)
    r0 = (x @ wr0 + br0) * dilation
    r1 = (x @ wr1 + br1) * dilation
    cls = cls.reshape(N, H, W, out_f).transpose(0, 3, 1, 2)
    r0 = r0.reshape(N, H, W, 2 * out_f).transpose(0, 3, 1, 2).reshape(N, out_f, 2, H, W)
    r1 = r1.reshape(N, H, W, 2 * out_f).transpose(0, 3, 1, 2).reshape(N, out_f, 2, H, W)
    return [cls, r0, r1]


def _make_params(key, C_in, out_f):
    k0, k1, k2, k3, k4, k5 = jax.random.split(key, 6)
    bound = 1.0 / (C_in ** 0.5)
    wc = jax.random.uniform(k0, (C_in, out_f), jnp.float32, -bound, bound)
    bc = jax.random.uniform(k1, (1, out_f), jnp.float32, -bound, bound)
    wr0 = 0.01 * jax.random.normal(k2, (C_in, 2 * out_f), dtype=jnp.float32)
    br0 = 0.01 * jax.random.normal(k3, (1, 2 * out_f), dtype=jnp.float32)
    wr1 = 0.01 * jax.random.normal(k4, (C_in, 2 * out_f), dtype=jnp.float32)
    br1 = 0.01 * jax.random.normal(k5, (1, 2 * out_f), dtype=jnp.float32)
    return (wc, bc, wr0, br0, wr1, br1)


if __name__ == "__main__":
    key = jax.random.PRNGKey(0)
    kp1, kx1, kp2, kx2 = jax.random.split(key, 4)

    # Case 1: small, tile-aligned spatial extent.
    N, C_in, H, W = 2, 32, 16, 16
    n_assoc = 4
    x = jax.random.normal(kx1, (N, C_in, H, W), dtype=jnp.float32)
    params = _make_params(kp1, C_in, n_assoc)
    outs = jax.block_until_ready(
        npart_association_fields(x, params, n_associations=n_assoc))
    refs = _reference(x, params, n_associations=n_assoc)
    assert outs[0].shape == (N, n_assoc, H, W)
    assert outs[1].shape == (N, n_assoc, 2, H, W)
    assert outs[2].shape == (N, n_assoc, 2, H, W)
    for o, r in zip(outs, refs):
        assert o.shape == r.shape, (o.shape, r.shape)
        assert jnp.allclose(o, r, atol=1e-5, rtol=1e-5)

    # Case 2: non-128-multiple H*W (masked boundary block) and non-8-aligned
    # out_f (exercises the sublane-aligned fused-weight offsets).
    N2, C2, H2, W2 = 1, 16, 15, 13
    n_assoc2 = 19
    x2 = jax.random.normal(kx2, (N2, C2, H2, W2), dtype=jnp.float32)
    params2 = _make_params(kp2, C2, n_assoc2)
    outs2 = jax.block_until_ready(
        npart_association_fields(x2, params2, n_associations=n_assoc2))
    refs2 = _reference(x2, params2, n_associations=n_assoc2)
    assert outs2[0].shape == (N2, n_assoc2, H2, W2)
    assert outs2[1].shape == (N2, n_assoc2, 2, H2, W2)
    assert outs2[2].shape == (N2, n_assoc2, 2, H2, W2)
    for o, r in zip(outs2, refs2):
        assert o.shape == r.shape, (o.shape, r.shape)
        assert jnp.allclose(o, r, atol=1e-5, rtol=1e-5)

    print("KERNEL_OK")
</pallas_src>

<mosaic_0001>
module attributes {stable_mosaic.version = 11 : i64} {
  func.func @_paf_fused_kernel(%arg0: i32, %arg1: i32, %arg2: memref<1x32x128xf32, #tpu.memory_space<vmem>>, %arg3: memref<24x32xf32, #tpu.memory_space<vmem>>, %arg4: memref<24x1xf32, #tpu.memory_space<vmem>>, %arg5: memref<1x4x128xf32, #tpu.memory_space<vmem>>, %arg6: memref<1x8x128xf32, #tpu.memory_space<vmem>>, %arg7: memref<1x8x128xf32, #tpu.memory_space<vmem>>) attributes {dimension_semantics = [#tpu.dimension_semantics<parallel>, #tpu.dimension_semantics<parallel>], iteration_bounds = array<i64: 2, 2>, scalar_prefetch = 0 : i64, scratch_operands = 0 : i64, tpu.core_type = #tpu.core_type<tc>, window_params = [{transform_indices = @transform_0, window_bounds = array<i64: 1, 32, 128>}, {pipeline_mode = #tpu.pipeline_mode<synchronous>, transform_indices = @transform_1, window_bounds = array<i64: 24, 32>}, {pipeline_mode = #tpu.pipeline_mode<synchronous>, transform_indices = @transform_2, window_bounds = array<i64: 24, 1>}, {transform_indices = @transform_3, window_bounds = array<i64: 1, 4, 128>}, {transform_indices = @transform_4, window_bounds = array<i64: 1, 8, 128>}, {transform_indices = @transform_5, window_bounds = array<i64: 1, 8, 128>}]} {
    %c0 = arith.constant 0 : index
    %c0_0 = arith.constant 0 : index
    %0 = vector.load %arg3[%c0, %c0_0] : memref<24x32xf32, #tpu.memory_space<vmem>>, vector<24x32xf32>
    %c0_1 = arith.constant 0 : index
    %c0_2 = arith.constant 0 : index
    %c0_3 = arith.constant 0 : index
    %1 = vector.load %arg2[%c0_1, %c0_2, %c0_3] : memref<1x32x128xf32, #tpu.memory_space<vmem>>, vector<1x32x128xf32>
    %2 = vector.shape_cast %1 : vector<1x32x128xf32> to vector<32x128xf32>
    %cst = arith.constant dense<0.000000e+00> : vector<24x128xf32>
    %3 = tpu.matmul %0, %2, %cst {dimension_numbers = #tpu.dot_dimension_numbers<[1], [0], [0], [1], [0, 0, 1, 1], [], []>} : vector<24x32xf32>, vector<32x128xf32>, vector<24x128xf32> -> vector<24x128xf32>
    %c0_4 = arith.constant 0 : index
    %c0_5 = arith.constant 0 : index
    %4 = vector.load %arg4[%c0_4, %c0_5] : memref<24x1xf32, #tpu.memory_space<vmem>>, vector<24x1xf32>
    %5 = vector.broadcast %4 : vector<24x1xf32> to vector<24x128xf32>
    %6 = arith.addf %3, %5 : vector<24x128xf32>
    %7 = vector.extract_strided_slice %6 {offsets = [0, 0], sizes = [4, 128], strides = [1, 1]} : vector<24x128xf32> to vector<4x128xf32>
    %8 = arith.negf %7 : vector<4x128xf32>
    %9 = math.exp %8 : vector<4x128xf32>
    %cst_6 = arith.constant 1.000000e+00 : f32
    %10 = vector.broadcast %cst_6 : f32 to vector<4x128xf32>
    %11 = arith.addf %10, %9 : vector<4x128xf32>
    %12 = arith.divf %10, %11 : vector<4x128xf32>
    %c0_7 = arith.constant 0 : index
    %c0_8 = arith.constant 0 : index
    %c0_9 = arith.constant 0 : index
    %13 = vector.load %arg5[%c0_7, %c0_8, %c0_9] : memref<1x4x128xf32, #tpu.memory_space<vmem>>, vector<1x4x128xf32>
    %14 = vector.shape_cast %13 : vector<1x4x128xf32> to vector<4x128xf32>
    %15 = vector.shape_cast %12 : vector<4x128xf32> to vector<1x4x128xf32>
    tpu.vector_store %arg5[%c0_7, %c0_8, %c0_9], %15 {strides = array<i32>} : memref<1x4x128xf32, #tpu.memory_space<vmem>>, vector<1x4x128xf32>,
    %16 = vector.extract_strided_slice %6 {offsets = [8, 0], sizes = [8, 128], strides = [1, 1]} : vector<24x128xf32> to vector<8x128xf32>
    %17 = vector.extract_strided_slice %6 {offsets = [16, 0], sizes = [8, 128], strides = [1, 1]} : vector<24x128xf32> to vector<8x128xf32>
    %c0_10 = arith.constant 0 : index
    %c0_11 = arith.constant 0 : index
    %c0_12 = arith.constant 0 : index
    %18 = vector.load %arg6[%c0_10, %c0_11, %c0_12] : memref<1x8x128xf32, #tpu.memory_space<vmem>>, vector<1x8x128xf32>
    %19 = vector.shape_cast %18 : vector<1x8x128xf32> to vector<8x128xf32>
    %20 = vector.shape_cast %16 : vector<8x128xf32> to vector<1x8x128xf32>
    tpu.vector_store %arg6[%c0_10, %c0_11, %c0_12], %20 {strides = array<i32>} : memref<1x8x128xf32, #tpu.memory_space<vmem>>, vector<1x8x128xf32>,
    %c0_13 = arith.constant 0 : index
    %c0_14 = arith.constant 0 : index
    %c0_15 = arith.constant 0 : index
    %21 = vector.load %arg7[%c0_13, %c0_14, %c0_15] : memref<1x8x128xf32, #tpu.memory_space<vmem>>, vector<1x8x128xf32>
    %22 = vector.shape_cast %21 : vector<1x8x128xf32> to vector<8x128xf32>
    %23 = vector.shape_cast %17 : vector<8x128xf32> to vector<1x8x128xf32>
    tpu.vector_store %arg7[%c0_13, %c0_14, %c0_15], %23 {strides = array<i32>} : memref<1x8x128xf32, #tpu.memory_space<vmem>>, vector<1x8x128xf32>,
    return
  }
  func.func @transform_0(%arg0: i32, %arg1: i32) -> (i32, i32, i32) {
    %c0_i32 = arith.constant 0 : i32
    %c0_i32_0 = arith.constant 0 : i32
    return %arg0, %c0_i32, %arg1 : i32, i32, i32
  }
  func.func @transform_1(%arg0: i32, %arg1: i32) -> (i32, i32) {
    %c0_i32 = arith.constant 0 : i32
    %c0_i32_0 = arith.constant 0 : i32
    %c0_i32_1 = arith.constant 0 : i32
    return %c0_i32, %c0_i32_0 : i32, i32
  }
  func.func @transform_2(%arg0: i32, %arg1: i32) -> (i32, i32) {
    %c0_i32 = arith.constant 0 : i32
    %c0_i32_0 = arith.constant 0 : i32
    %c0_i32_1 = arith.constant 0 : i32
    return %c0_i32, %c0_i32_0 : i32, i32
  }
  func.func @transform_3(%arg0: i32, %arg1: i32) -> (i32, i32, i32) {
    %c0_i32 = arith.constant 0 : i32
    %c0_i32_0 = arith.constant 0 : i32
    return %arg0, %c0_i32, %arg1 : i32, i32, i32
  }
  func.func @transform_4(%arg0: i32, %arg1: i32) -> (i32, i32, i32) {
    %c0_i32 = arith.constant 0 : i32
    %c0_i32_0 = arith.constant 0 : i32
    return %arg0, %c0_i32, %arg1 : i32, i32, i32
  }
  func.func @transform_5(%arg0: i32, %arg1: i32) -> (i32, i32, i32) {
    %c0_i32 = arith.constant 0 : i32
    %c0_i32_0 = arith.constant 0 : i32
    return %arg0, %c0_i32, %arg1 : i32, i32, i32
  }
}

</mosaic_0001>

<llo_original>
// kernel: tpu_custom_call.1
$region0: #{tpu_custom_call.1}
  #allocation0 [shape = 'u32[]', space=smem, size = 0x4, offset = 0x4, fixed_abs, tag = 'smem constant byte address 0x4 - core index']
  #allocation1 [shape = 'u32[144,128]{1,0:T(1,128)}', space=vmem, size = 0x12000, scoped, tag = 'internal scratch']
  %s0 = inlined_call_operand.hbm [shape: f32[2,32,256], index: 0, kind: input, shape index: {}]
  %s1 = inlined_call_operand.vmem [shape: f32[24,32], index: 1, kind: input, shape index: {}]
  %s2 = inlined_call_operand.vmem [shape: f32[24,1], index: 2, kind: input, shape index: {}]
  %s3 = inlined_call_operand.hbm [shape: f32[2,4,256], index: 3, kind: output, shape index: {0}]
  %s4 = inlined_call_operand.hbm [shape: f32[2,8,256], index: 4, kind: output, shape index: {1}]
  %s5 = inlined_call_operand.hbm [shape: f32[2,8,256], index: 5, kind: output, shape index: {2}]
  %6 = xla_tuple %s3, %s4, %s5
  %s7 = sld [smem:[#allocation0]]
  $region65: #{tpu_custom_call.1} parent=0
    _
  %s9 = ssub.s32 1, %s7
  %s10 = scalar_select 0, %s9, %s7
  $region1: #{tpu_custom_call.1} parent=0
    #allocation2 [shape = 'u8[32768]{0}', space=vmem, size = 0x8000, scoped, tag = 'input window, operand 0']
    #allocation3 [shape = 's32[2]{0}', space=sflag, size = 0x8, scoped, tag = 'scoped memory for tpu_custom_call.1']
    #allocation4 [shape = 's32[2]{0}', space=sflag, size = 0x8, scoped, tag = 'scoped memory for tpu_custom_call.1']
    #allocation5 [shape = 'u8[4096]{0}', space=vmem, size = 0x1000, scoped, tag = 'output window, operand 0']
    #allocation6 [shape = 'u8[8192]{0}', space=vmem, size = 0x2000, scoped, tag = 'output window, operand 1']
    #allocation7 [shape = 's32[2]{0}', space=sflag, size = 0x8, scoped, tag = 'scoped memory for tpu_custom_call.1']
    #allocation8 [shape = 'u8[8192]{0}', space=vmem, size = 0x2000, scoped, tag = 'output window, operand 2']
    %11 = vsyncpa [#allocation3], 0
    %s12 = scalar_lea.sflag [#allocation3], 1
    %13 = vsyncpa %s12, 0
    %14 = vsyncpa [#allocation4], 0
    %s15 = scalar_lea.sflag [#allocation4], 1
    %16 = vsyncpa %s15, 0
    %17 = vsyncpa [#allocation7], 0
    %s18 = scalar_lea.sflag [#allocation7], 1
    %19 = vsyncpa %s18, 0
    loop: start=0, step=1, limit=6
    $region2: #{tpu_custom_call.1} parent=1 // loop_pre_header
      _
    $region3: #{tpu_custom_call.1} parent=1 // loop_header
      %s21 = sphi 0, %s25
      %p22 = scmp.ge.s32.totalorder %s21, 6
      %s28 = sphi 0, %s40
      %s29 = sphi 0, %s36
      %s30 = sphi 0, %s28
      %s31 = sphi 0, %s29
      %s32 = sphi 0, %s30
      %s33 = sphi 0, %s31
      %s45 = sphi 0, %s47
      %s48 = sphi 0, %s45
      %s49 = sphi 0, %s48
      %s65 = sphi 0, %s49
      %s69 = sphi 0, %s69
      %s71 = sphi 0, %s69
      %s72 = sphi 0, %s71
      %s86 = sphi 0, %s72
      %s90 = sphi 0, %s90
      %s92 = sphi 0, %s90
      %s93 = sphi 0, %s92
      %s107 = sphi 0, %s93
      %s115 = sphi 0, %s117
      %s118 = sphi 0, %s115
      %s119 = sphi 0, %s118
      %s135 = sphi 0, %s119
      %s143 = sphi 0, %s145
      %s146 = sphi 0, %s143
      %s147 = sphi 0, %s146
      %s163 = sphi 0, %s147
      %s171 = sphi 0, %s173
      %s174 = sphi 0, %s171
      %s175 = sphi 0, %s174
      %s191 = sphi 0, %s175
    $region4: #{tpu_custom_call.1} parent=1 // loop_header_branch
      %24 = sbr.rel (%p22) target = $region8
    $region5: #{tpu_custom_call.1} parent=1 // loop_body
      %s26 = ssub.s32 %s21, 1
      %s27 = ssub.s32 %s21, 2
      %s34 = sadd.s32 1, %s29
      %p35 = scmp.ge.s32.totalorder %s34, 2
      %s36 = scalar_select %p35, 0, %s34
      %s37 = sadd.s32 1, %s28
      %s38 = scalar_select %p35, %s37, %s28
      %p39 = scmp.ge.s32.totalorder %s38, 2
      %s40 = scalar_select %p39, 0, %s38
      %s41 = ssub.s32 %s28, %s40
      %s42 = ssub.s32 %s29, %s36
      %s43 = sor.u32 %s41, %s42
      %p44 = scmp.eq.s32.totalorder %s43, 0
      %s46 = sadd.s32 %s45, 1
      %s47 = scalar_select %p44, %s45, %s46
      %p50 = pneg %p44
      %p51 = scmp.eq.s32.totalorder %s21, 3
      %p52 = por %p50, %p51
      %p53 = scmp.ne.s32.totalorder %s45, %s48
      %p54 = scmp.eq.s32.totalorder %s21, 0
      %p55 = por %p53, %p54
      %p56 = scmp.ne.s32.totalorder %s45, %s48
      %p57 = scmp.eq.s32.totalorder %s26, 3
      %p58 = por %p56, %p57
      %p59 = scmp.ne.s32.totalorder %s48, %s49
      %p60 = scmp.eq.s32.totalorder %s26, 0
      %p61 = por %p59, %p60
      %p62 = scmp.ne.s32.totalorder %s48, %s49
      %p63 = scmp.eq.s32.totalorder %s27, 3
      %p64 = por %p62, %p63
      %p66 = scmp.ne.s32.totalorder %s49, %s65
      %p67 = scmp.eq.s32.totalorder %s27, 0
      %p68 = por %p66, %p67
      %s70 = sadd.s32 %s69, 1
      %p73 = scmp.eq.s32.totalorder %s21, 3
      %p74 = scmp.ne.s32.totalorder %s69, %s71
      %p75 = scmp.eq.s32.totalorder %s21, 0
      %p76 = por %p74, %p75
      %p77 = scmp.ne.s32.totalorder %s69, %s71
      %p78 = scmp.eq.s32.totalorder %s26, 3
      %p79 = por %p77, %p78
      %p80 = scmp.ne.s32.totalorder %s71, %s72
      %p81 = scmp.eq.s32.totalorder %s26, 0
      %p82 = por %p80, %p81
      %p83 = scmp.ne.s32.totalorder %s71, %s72
      %p84 = scmp.eq.s32.totalorder %s27, 3
      %p85 = por %p83, %p84
      %p87 = scmp.ne.s32.totalorder %s72, %s86
      %p88 = scmp.eq.s32.totalorder %s27, 0
      %p89 = por %p87, %p88
      %s91 = sadd.s32 %s90, 1
      %p94 = scmp.eq.s32.totalorder %s21, 3
      %p95 = scmp.ne.s32.totalorder %s90, %s92
      %p96 = scmp.eq.s32.totalorder %s21, 0
      %p97 = por %p95, %p96
      %p98 = scmp.ne.s32.totalorder %s90, %s92
      %p99 = scmp.eq.s32.totalorder %s26, 3
      %p100 = por %p98, %p99
      %p101 = scmp.ne.s32.totalorder %s92, %s93
      %p102 = scmp.eq.s32.totalorder %s26, 0
      %p103 = por %p101, %p102
      %p104 = scmp.ne.s32.totalorder %s92, %s93
      %p105 = scmp.eq.s32.totalorder %s27, 3
      %p106 = por %p104, %p105
      %p108 = scmp.ne.s32.totalorder %s93, %s107
      %p109 = scmp.eq.s32.totalorder %s27, 0
      %p110 = por %p108, %p109
      %s111 = ssub.s32 %s28, %s40
      %s112 = ssub.s32 %s29, %s36
      %s113 = sor.u32 %s111, %s112
      %p114 = scmp.eq.s32.totalorder %s113, 0
      %s116 = sadd.s32 %s115, 1
      %s117 = scalar_select %p114, %s115, %s116
      %p120 = pneg %p114
      %p121 = scmp.eq.s32.totalorder %s21, 3
      %p122 = por %p120, %p121
      %p123 = scmp.ne.s32.totalorder %s115, %s118
      %p124 = scmp.eq.s32.totalorder %s21, 0
      %p125 = por %p123, %p124
      %p126 = scmp.ne.s32.totalorder %s115, %s118
      %p127 = scmp.eq.s32.totalorder %s26, 3
      %p128 = por %p126, %p127
      %p129 = scmp.ne.s32.totalorder %s118, %s119
      %p130 = scmp.eq.s32.totalorder %s26, 0
      %p131 = por %p129, %p130
      %p132 = scmp.ne.s32.totalorder %s118, %s119
      %p133 = scmp.eq.s32.totalorder %s27, 3
      %p134 = por %p132, %p133
      %p136 = scmp.ne.s32.totalorder %s119, %s135
      %p137 = scmp.eq.s32.totalorder %s27, 0
      %p138 = por %p136, %p137
      %s139 = ssub.s32 %s28, %s40
      %s140 = ssub.s32 %s29, %s36
      %s141 = sor.u32 %s139, %s140
      %p142 = scmp.eq.s32.totalorder %s141, 0
      %s144 = sadd.s32 %s143, 1
      %s145 = scalar_select %p142, %s143, %s144
      %p148 = pneg %p142
      %p149 = scmp.eq.s32.totalorder %s21, 3
      %p150 = por %p148, %p149
      %p151 = scmp.ne.s32.totalorder %s143, %s146
      %p152 = scmp.eq.s32.totalorder %s21, 0
      %p153 = por %p151, %p152
      %p154 = scmp.ne.s32.totalorder %s143, %s146
      %p155 = scmp.eq.s32.totalorder %s26, 3
      %p156 = por %p154, %p155
      %p157 = scmp.ne.s32.totalorder %s146, %s147
      %p158 = scmp.eq.s32.totalorder %s26, 0
      %p159 = por %p157, %p158
      %p160 = scmp.ne.s32.totalorder %s146, %s147
      %p161 = scmp.eq.s32.totalorder %s27, 3
      %p162 = por %p160, %p161
      %p164 = scmp.ne.s32.totalorder %s147, %s163
      %p165 = scmp.eq.s32.totalorder %s27, 0
      %p166 = por %p164, %p165
      %s167 = ssub.s32 %s28, %s40
      %s168 = ssub.s32 %s29, %s36
      %s169 = sor.u32 %s167, %s168
      %p170 = scmp.eq.s32.totalorder %s169, 0
      %s172 = sadd.s32 %s171, 1
      %s173 = scalar_select %p170, %s171, %s172
      %p176 = pneg %p170
      %p177 = scmp.eq.s32.totalorder %s21, 3
      %p178 = por %p176, %p177
      %p179 = scmp.ne.s32.totalorder %s171, %s174
      %p180 = scmp.eq.s32.totalorder %s21, 0
      %p181 = por %p179, %p180
      %p182 = scmp.ne.s32.totalorder %s171, %s174
      %p183 = scmp.eq.s32.totalorder %s26, 3
      %p184 = por %p182, %p183
      %p185 = scmp.ne.s32.totalorder %s174, %s175
      %p186 = scmp.eq.s32.totalorder %s26, 0
      %p187 = por %p185, %p186
      %p188 = scmp.ne.s32.totalorder %s174, %s175
      %p189 = scmp.eq.s32.totalorder %s27, 3
      %p190 = por %p188, %p189
      %p192 = scmp.ne.s32.totalorder %s175, %s191
      %p193 = scmp.eq.s32.totalorder %s27, 0
      %p194 = por %p192, %p193
      %p195 = scmp.le.s32.totalorder 1, %s21
      %p196 = scmp.lt.s32.totalorder %s21, 5
      %p197 = pnand %p195, %p196
      %p198 = pneg %p197
      // Predicated region
      $region9: #{tpu_custom_call.1} parent=5 // pred_check
        _
      $region10: #{tpu_custom_call.1} parent=5 // pred_check_branch
        %200 = sbr.rel (%p197) target = $region12
      $region11: #{tpu_custom_call.1} parent=5 // pred_region
        %s201 = ssub.s32 %s21, 1
        // Predicated region
        $region13: #{tpu_custom_call.1} parent=11 // pred_check
          %p202 = pneg %p82
        $region14: #{tpu_custom_call.1} parent=11 // pred_check_branch
          %204 = sbr.rel (%p202) target = $region16
        $region15: #{tpu_custom_call.1} parent=11 // pred_region
          _
        $region16: #{tpu_custom_call.1} parent=11 // pred_fallthru
          _
        // Predicated region
        $region17: #{tpu_custom_call.1} parent=11 // pred_check
          %p205 = pneg %p103
        $region18: #{tpu_custom_call.1} parent=11 // pred_check_branch
          %207 = sbr.rel (%p205) target = $region20
        $region19: #{tpu_custom_call.1} parent=11 // pred_region
          _
        $region20: #{tpu_custom_call.1} parent=11 // pred_fallthru
          _
      $region12: #{tpu_custom_call.1} parent=5 // pred_fallthru
        _
      %p208 = scmp.lt.s32.totalorder %s21, 4
      // Predicated region
      $region21: #{tpu_custom_call.1} parent=5 // pred_check
        %p209 = pneg %p208
      $region22: #{tpu_custom_call.1} parent=5 // pred_check_branch
        %211 = sbr.rel (%p209) target = $region24
      $region23: #{tpu_custom_call.1} parent=5 // pred_region
        // Predicated region
        $region25: #{tpu_custom_call.1} parent=23 // pred_check
          %p212 = pneg %p55
        $region26: #{tpu_custom_call.1} parent=23 // pred_check_branch
          %214 = sbr.rel (%p212) target = $region28
        $region27: #{tpu_custom_call.1} parent=23 // pred_region
          %s215 = sand.u32 %s45, 1
          %s216 = scalar_lea.sflag [#allocation3], %s215
          %s217 = sand.u32 %s45, 1
          %s218 = smul.addr %s217, 32
          %s219 = scalar_lea.vmem [#allocation2], %s218
          %s221 = ssub.s32 512, 512
          %222 = vsyncadd %s216, %s221
          %s223 = smul.addr %s28, 8
          %s224 = sadd.s32 %s29, %s223
          %s225 = smul.addr %s224, 128
          %s226 = scalar_lea.hbm %s0, %s225
          %s227 = sshll.u32 %s219, 4
          %s228 = int_to_ptr.vmem [resolvable:$true] %s227
          %233 = dma.hbm_to_vmem [thread:$0]  %s226, 512, %s228, %s216, 256, 128, 8
        $region28: #{tpu_custom_call.1} parent=23 // pred_fallthru
          _
      $region24: #{tpu_custom_call.1} parent=5 // pred_fallthru
        _
      %p234 = scmp.le.s32.totalorder 1, %s21
      %p235 = scmp.lt.s32.totalorder %s21, 5
      %p236 = pnand %p234, %p235
      %p237 = pneg %p236
      // Predicated region
      $region29: #{tpu_custom_call.1} parent=5 // pred_check
        _
      $region30: #{tpu_custom_call.1} parent=5 // pred_check_branch
        %239 = sbr.rel (%p236) target = $region32
      $region31: #{tpu_custom_call.1} parent=5 // pred_region
        %s240 = ssub.s32 %s21, 1
        %s241 = sand.u32 %s48, 1
        %s242 = scalar_lea.sflag [#allocation3], %s241
        %s243 = sand.u32 %s48, 1
        %s244 = smul.addr %s243, 32
        %s245 = scalar_lea.vmem [#allocation2], %s244
        // Predicated region
        $region33: #{tpu_custom_call.1} parent=31 // pred_check
          %p246 = pneg %p61
        $region34: #{tpu_custom_call.1} parent=31 // pred_check_branch
          %248 = sbr.rel (%p246) target = $region36
        $region35: #{tpu_custom_call.1} parent=31 // pred_region
          %249 = dma.done %s242, 512
        $region36: #{tpu_custom_call.1} parent=31 // pred_fallthru
          _
        %s250 = sand.u32 %s48, 1
        %s251 = scalar_lea.sflag [#allocation3], %s250
        %s252 = sand.u32 %s48, 1
        %s253 = smul.addr %s252, 32
        %s254 = scalar_lea.vmem [#allocation2], %s253
        %p255 = pneg %p61
        %p256 = pneg %p58
        %p257 = pneg %p82
        %p258 = pneg %p79
        %p259 = pneg %p103
        %p260 = pneg %p100
        %p261 = pneg %p131
        %p262 = pneg %p128
        %s263 = sand.u32 %s118, 1
        %s264 = scalar_lea.sflag [#allocation4], %s263
        %s265 = sand.u32 %s118, 1
        %s266 = smul.addr %s265, 4
        %s267 = scalar_lea.vmem [#allocation5], %s266
        %p268 = pneg %p159
        %p269 = pneg %p156
        %s270 = sand.u32 %s26, 1
        %s271 = scalar_lea.sflag [#allocation7], %s270
        %s272 = sand.u32 %s146, 1
        %s273 = smul.addr %s272, 8
        %s274 = scalar_lea.vmem [#allocation6], %s273
        %p275 = pneg %p187
        %p276 = pneg %p184
        %s277 = sand.u32 %s26, 1
        %s278 = scalar_lea.sflag [#allocation7], %s277
        %s279 = sand.u32 %s174, 1
        %s280 = smul.addr %s279, 8
        %s281 = scalar_lea.vmem [#allocation8], %s280
        %v282 = vld [vmem:[%s1] sm:$0xff]
        %v283 = vld [vmem:[%s1 + $0x8] sm:$0xff]
        %v284 = vld [vmem:[%s1 + $0x10] sm:$0xff]
        %v285 = vld [vmem:[%s245] sm:$0xff]
        %v286 = vld [vmem:[%s245 + $0x8] sm:$0xff]
        %v287 = vld [vmem:[%s245 + $0x10] sm:$0xff]
        %v288 = vld [vmem:[%s245 + $0x18] sm:$0xff]
        %v289 = vld [vmem:[%s2] sm:$0xff]
        %v290 = vld [vmem:[%s2 + $0x8] sm:$0xff]
        %v291 = vld [vmem:[%s2 + $0x10] sm:$0xff]
        %293 = vset.pattern.permute.xlu0 0
        %294 = vperm.xlu0 %293, %v289
        %v295 = vpop.permute.xlu0 %294
        %298 = vset.pattern.permute.xlu0 0
        %299 = vperm.xlu0 %298, %v290
        %v300 = vpop.permute.xlu0 %299
        %303 = vset.pattern.permute.xlu0 0
        %304 = vperm.xlu0 %303, %v291
        %v305 = vpop.permute.xlu0 %304
        %vm307 = vcmask 261120
        %v309 = vsel %vm307, %v282, 0
        %v312 = vsel %vm307, %v283, 0
        %v315 = vsel %vm307, %v284, 0
        %317 = vmatprep.subr.mxu0 0.0
        %318 = vmatpush1.msra.mxu0 0.0
        %319 = vmatprep.subr.mxu0 0.0
        %320 = vmatpush1.msra.mxu0 0.0
        %321 = vmatprep.subr.mxu0 0.0
        %322 = vmatpush1.msra.mxu0 0.0
        %323 = vmatprep.subr.mxu0 0.0
        %324 = vmatpush1.msra.mxu0 0.0
        %325 = vmatprep.subr.mxu0 0.0
        %326 = vmatpush1.msra.mxu0 0.0
        %327 = vmatprep.subr.mxu0 0.0
        %328 = vmatpush1.msra.mxu0 0.0
        %329 = vmatprep.subr.mxu0 0.0
        %330 = vmatpush1.msra.mxu0 0.0
        %331 = vmatprep.subr.mxu0 0.0
        %332 = vmatpush1.msra.mxu0 0.0
        %333 = vmatprep.subr.mxu0 0.0
        %334 = vmatpush1.msra.mxu0 0.0
        %335 = vmatprep.subr.mxu0 0.0
        %336 = vmatpush1.msra.mxu0 0.0
        %337 = vmatprep.subr.mxu0 0.0
        %338 = vmatpush1.msra.mxu0 0.0
        %339 = vmatprep.subr.mxu0 0.0
        %340 = vmatpush1.msra.mxu0 0.0
        %341 = vmatprep.subr.mxu0 0.0
        %342 = vmatpush1.msra.mxu0 %v288
        %343 = vmatprep.subr.mxu0 0.0
        %344 = vmatpush1.msra.mxu0 %v287
        %345 = vmatprep.subr.mxu0 0.0
        %346 = vmatpush1.msra.mxu0 %v286
        %347 = vmatprep.subr.mxu0 0.0
        %348 = vmatpush1.msra.mxu0 %v285
        %349 = vmatprep.subr.mxu0 0.0
        %350 = vmatpush2.msra.mxu0 0.0
        %351 = vmatprep.subr.mxu0 0.0
        %352 = vmatpush2.msra.mxu0 0.0
        %353 = vmatprep.subr.mxu0 0.0
        %354 = vmatpush2.msra.mxu0 0.0
        %355 = vmatprep.subr.mxu0 0.0
        %356 = vmatpush2.msra.mxu0 0.0
        %357 = vmatprep.subr.mxu0 0.0
        %358 = vmatpush2.msra.mxu0 0.0
        %359 = vmatprep.subr.mxu0 0.0
        %360 = vmatpush2.msra.mxu0 0.0
        %361 = vmatprep.subr.mxu0 0.0
        %362 = vmatpush2.msra.mxu0 0.0
        %363 = vmatprep.subr.mxu0 0.0
        %364 = vmatpush2.msra.mxu0 0.0
        %365 = vmatprep.subr.mxu0 0.0
        %366 = vmatpush2.msra.mxu0 0.0
        %367 = vmatprep.subr.mxu0 0.0
        %368 = vmatpush2.msra.mxu0 0.0
        %369 = vmatprep.subr.mxu0 0.0
        %370 = vmatpush2.msra.mxu0 0.0
        %371 = vmatprep.subr.mxu0 0.0
        %372 = vmatpush2.msra.mxu0 0.0
        %373 = vmatprep.subr.mxu0 0.0
        %374 = vmatpush2.msra.mxu0 0.0
        %375 = vmatprep.subr.mxu0 0.0
        %376 = vmatpush2.msra.mxu0 0.0
        %377 = vmatprep.subr.mxu0 0.0
        %378 = vmatpush2.msra.mxu0 0.0
        %379 = vmatprep.subr.mxu0 0.0
        %380 = vmatpush2.msra.mxu0 0.0
        %381 = vmatprep.mubr.f32.mxu0 0.0
        %382 = vmatmul.mubr.f32.gmra.mxu0 %v309
        %v383 = vpop.f32.mrf.mxu0
        %v384 = vadd.f32 %v295, %v383
        %v385 = vpop.f32.mrf.mxu0
        %386 = vmatprep.mubr.f32.mxu0 0.0
        %387 = vmatmul.mubr.f32.gmra.mxu0 %v312
        %v388 = vpop.f32.mrf.mxu0
        %v389 = vadd.f32 %v300, %v388
        %v390 = vpop.f32.mrf.mxu0
        %391 = vmatprep.mubr.f32.mxu0 0.0
        %392 = vmatmul.mubr.f32.gmra.mxu0 %v315
        %v393 = vpop.f32.mrf.mxu0
        %v394 = vadd.f32 %v305, %v393
        %v395 = vpop.f32.mrf.mxu0
        %396 = vdwg.mxu0
        %v397 = vxor.u32 %v384, 2147483648
        %v398 = vmul.f32 %v397, 1.442695
        %v399 = vpow.pop %v398
        %v400 = vadd.f32 %v399, 1.0
        %v401 = vrcp.pop %v400
        %v402 = vmul.f32 1.0, %v401
        %403 = vst [vmem:[%s267] sm:$0xf] %v402
        %404 = vst [vmem:[%s274] sm:$0xff] %v389
        %405 = vst [vmem:[%s281] sm:$0xff] %v394
        %s406 = sand.u32 %s118, 1
        %s407 = scalar_lea.sflag [#allocation4], %s406
        %s408 = sand.u32 %s118, 1
        %s409 = smul.addr %s408, 4
        %s410 = scalar_lea.vmem [#allocation5], %s409
        %s411 = sand.u32 %s26, 1
        %s412 = scalar_lea.sflag [#allocation7], %s411
        %s413 = sand.u32 %s146, 1
        %s414 = smul.addr %s413, 8
        %s415 = scalar_lea.vmem [#allocation6], %s414
        %s416 = sand.u32 %s26, 1
        %s417 = scalar_lea.sflag [#allocation7], %s416
        %s418 = sand.u32 %s174, 1
        %s419 = smul.addr %s418, 8
        %s420 = scalar_lea.vmem [#allocation8], %s419
        // Predicated region
        $region37: #{tpu_custom_call.1} parent=31 // pred_check
          %p421 = pneg %p128
        $region38: #{tpu_custom_call.1} parent=31 // pred_check_branch
          %423 = sbr.rel (%p421) target = $region40
        $region39: #{tpu_custom_call.1} parent=31 // pred_region
          %s425 = ssub.s32 64, 64
          %426 = vsyncadd %s407, %s425
          %s427 = smul.addr %s30, 2
          %s428 = sadd.s32 %s31, %s427
          %s429 = smul.addr %s428, 64
          %s430 = scalar_lea.hbm %s3, %s429
          %s432 = sshll.u32 %s410, 4
          %s433 = int_to_ptr.vmem [resolvable:$true] %s432
          %435 = dma.vmem_to_hbm [thread:$0]  %s433, 64, %s430, %s407
        $region40: #{tpu_custom_call.1} parent=31 // pred_fallthru
          _
        // Predicated region
        $region41: #{tpu_custom_call.1} parent=31 // pred_check
          %p436 = pneg %p156
        $region42: #{tpu_custom_call.1} parent=31 // pred_check_branch
          %438 = sbr.rel (%p436) target = $region44
        $region43: #{tpu_custom_call.1} parent=31 // pred_region
          %s440 = ssub.s32 128, 128
          %441 = vsyncadd %s412, %s440
          %s442 = smul.addr %s30, 2
          %s443 = sadd.s32 %s31, %s442
          %s444 = smul.addr %s443, 128
          %s445 = scalar_lea.hbm %s4, %s444
          %s447 = sshll.u32 %s415, 4
          %s448 = int_to_ptr.vmem [resolvable:$true] %s447
          %450 = dma.vmem_to_hbm [thread:$0]  %s448, 128, %s445, %s412
        $region44: #{tpu_custom_call.1} parent=31 // pred_fallthru
          _
        // Predicated region
        $region45: #{tpu_custom_call.1} parent=31 // pred_check
          %p451 = pneg %p184
        $region46: #{tpu_custom_call.1} parent=31 // pred_check_branch
          %453 = sbr.rel (%p451) target = $region48
        $region47: #{tpu_custom_call.1} parent=31 // pred_region
          %s455 = ssub.s32 128, 128
          %456 = vsyncadd %s417, %s455
          %s457 = smul.addr %s30, 2
          %s458 = sadd.s32 %s31, %s457
          %s459 = smul.addr %s458, 128
          %s460 = scalar_lea.hbm %s5, %s459
          %s462 = sshll.u32 %s420, 4
          %s463 = int_to_ptr.vmem [resolvable:$true] %s462
          %465 = dma.vmem_to_hbm [thread:$0]  %s463, 128, %s460, %s417
        $region48: #{tpu_custom_call.1} parent=31 // pred_fallthru
          _
      $region32: #{tpu_custom_call.1} parent=5 // pred_fallthru
        _
      %p466 = scmp.le.s32.totalorder 2, %s21
      // Predicated region
      $region49: #{tpu_custom_call.1} parent=5 // pred_check
        %p467 = pneg %p466
      $region50: #{tpu_custom_call.1} parent=5 // pred_check_branch
        %469 = sbr.rel (%p467) target = $region52
      $region51: #{tpu_custom_call.1} parent=5 // pred_region
        %s470 = ssub.s32 %s21, 2
        // Predicated region
        $region53: #{tpu_custom_call.1} parent=51 // pred_check
          %p471 = pneg %p134
        $region54: #{tpu_custom_call.1} parent=51 // pred_check_branch
          %473 = sbr.rel (%p471) target = $region56
        $region55: #{tpu_custom_call.1} parent=51 // pred_region
          %s474 = sand.u32 %s119, 1
          %s475 = scalar_lea.sflag [#allocation4], %s474
          %s476 = sand.u32 %s119, 1
          %s477 = smul.addr %s476, 4
          %s478 = scalar_lea.vmem [#allocation5], %s477
          %479 = dma.done %s475, 64
        $region56: #{tpu_custom_call.1} parent=51 // pred_fallthru
          _
        // Predicated region
        $region57: #{tpu_custom_call.1} parent=51 // pred_check
          %p480 = pneg %p162
        $region58: #{tpu_custom_call.1} parent=51 // pred_check_branch
          %482 = sbr.rel (%p480) target = $region60
        $region59: #{tpu_custom_call.1} parent=51 // pred_region
          %s483 = sand.u32 %s27, 1
          %s484 = scalar_lea.sflag [#allocation7], %s483
          %s485 = sand.u32 %s147, 1
          %s486 = smul.addr %s485, 8
          %s487 = scalar_lea.vmem [#allocation6], %s486
          %488 = dma.done %s484, 128
        $region60: #{tpu_custom_call.1} parent=51 // pred_fallthru
          _
        // Predicated region
        $region61: #{tpu_custom_call.1} parent=51 // pred_check
          %p489 = pneg %p190
        $region62: #{tpu_custom_call.1} parent=51 // pred_check_branch
          %491 = sbr.rel (%p489) target = $region64
        $region63: #{tpu_custom_call.1} parent=51 // pred_region
          %s492 = sand.u32 %s27, 1
          %s493 = scalar_lea.sflag [#allocation7], %s492
          %s494 = sand.u32 %s175, 1
          %s495 = smul.addr %s494, 8
          %s496 = scalar_lea.vmem [#allocation8], %s495
          %497 = dma.done %s493, 128
        $region64: #{tpu_custom_call.1} parent=51 // pred_fallthru
          _
      $region52: #{tpu_custom_call.1} parent=5 // pred_fallthru
        _
    $region6: #{tpu_custom_call.1} parent=1 // loop_footer
      %s25 = sadd.s32 1, %s21
    $region7: #{tpu_custom_call.1} parent=1 // loop_footer_branch
      %20 = sbr.rel target = $region3
    $region8: #{tpu_custom_call.1} parent=1 // loop_exit
      _
    %498 = vsyncpa [#allocation3], 1
    %s499 = scalar_lea.sflag [#allocation3], 1
    %500 = vsyncpa %s499, 1
    %501 = vsyncpa [#allocation4], 1
    %s502 = scalar_lea.sflag [#allocation4], 1
    %503 = vsyncpa %s502, 1
    %504 = vsyncpa [#allocation7], 1
    %s505 = scalar_lea.sflag [#allocation7], 1
    %506 = vsyncpa %s505, 1

</llo_original>
